<compile_context>
chip_gen: v6e
topology: v6e:2x2x1
jax: 0.10.0
libtpu: 0.0.40
codegen_flags: <defaults>
</compile_context>

<pallas_src>
import functools

import jax
import jax.numpy as jnp
from jax.experimental import pallas as pl
from jax.experimental.pallas import tpu as pltpu


# If the [N_pad, F] scatter accumulator fits this budget it stays resident in
# VMEM and src_fc + scatter run fused in a single pass over the edges.
_FUSED_SCATTER_ACC_BYTES = 8 * 1024 * 1024
# Only split a "parallel" row axis into >=2 grid steps (v7x: 2 TensorCores)
# once there is at least this much work per step.
_MIN_SPLIT_ROWS = 512


def _round_up(x, m):
    return ((x + m - 1) // m) * m


@functools.lru_cache(maxsize=None)
def _vmem_limit_bytes():
    """Generation-aware VMEM cap: ~48 MiB on v7x (64 MiB physical per TC),
    ~96 MiB on v5e/v6e (128 MiB physical)."""
    try:
        cap = int(pltpu.get_tpu_info().vmem_capacity_bytes)
    except Exception:
        cap = 64 * 1024 * 1024        # conservative (v7x per-core VMEM)
    return max(32 * 1024 * 1024, (cap * 3) // 4)


def _tile_rows_parallel(m, tmax):
    """(tile, padded_rows) for a 'parallel' row axis: tiles as large as
    possible, but keep >=2 grid steps once there is enough work so v7x's two
    TensorCores both get a share."""
    m8 = _round_up(max(int(m), 1), 8)
    if m8 <= tmax:
        if m8 >= 2 * _MIN_SPLIT_ROWS:
            t = _round_up((m8 + 1) // 2, 8)
            return t, 2 * t
        return m8, m8
    return tmax, _round_up(int(m), tmax)


def _tile_rows_seq(m, tmax):
    """(tile, padded_rows) for a sequential / reduction row axis."""
    m8 = _round_up(max(int(m), 1), 8)
    if m8 <= tmax:
        return m8, m8
    return tmax, _round_up(int(m), tmax)


def _pad_rows(x, m_pad):
    m = x.shape[0]
    return x if m_pad == m else jnp.pad(x, ((0, m_pad - m), (0, 0)))


# ------------------------- in-kernel MLP evaluation -------------------------

def _apply_mlp(x_parts, w0_refs, b0_ref, rest_refs, num_layers):
    """Evaluate an MLP (ReLU on hidden layers, linear output) on loaded inputs.

    The layer-0 input concat is fused as a sum of partial dots against
    row-slices of W0.  Weight operands are bf16 (MXU-native); activations are
    cast to bf16 per dot while accumulation, bias and ReLU stay f32.
    Intermediates never touch HBM.
    """
    h = None
    for x, w_ref in zip(x_parts, w0_refs):
        d = jnp.dot(x.astype(jnp.bfloat16), w_ref[...],
                    preferred_element_type=jnp.float32)
        h = d if h is None else h + d
    h = h + b0_ref[...]
    if num_layers > 1:
        h = jnp.maximum(h, 0.0)
    for li in range(1, num_layers):
        w_ref = rest_refs[2 * (li - 1)]
        b_ref = rest_refs[2 * (li - 1) + 1]
        h = jnp.dot(h.astype(jnp.bfloat16), w_ref[...],
                    preferred_element_type=jnp.float32) + b_ref[...]
        if li < num_layers - 1:
            h = jnp.maximum(h, 0.0)
    return h


# ----------------------------- Pallas kernels ------------------------------

def _fused_mlp_kernel(*refs, num_inputs, num_layers):
    """One row tile of a whole MLP, fully fused in VMEM (standalone form)."""
    o_ref = refs[-1]
    x_refs = refs[:num_inputs]
    w0_refs = refs[num_inputs:2 * num_inputs]
    b0_ref = refs[2 * num_inputs]
    rest = refs[2 * num_inputs + 1:-1]
    h = _apply_mlp([x[...] for x in x_refs], w0_refs, b0_ref, rest, num_layers)
    o_ref[...] = h.astype(o_ref.dtype)


def _edge_mlp_scatter_kernel(*refs, num_inputs, num_layers):
    """Per edge tile: run the src_fc MLP in-register, then scatter-add into a
    VMEM-resident [N_pad, F] output accumulator via a bf16 one-hot matmul."""
    dst_ref = refs[0]
    x_refs = refs[1:1 + num_inputs]
    w0_refs = refs[1 + num_inputs:1 + 2 * num_inputs]
    b0_ref = refs[1 + 2 * num_inputs]
    rest = refs[2 + 2 * num_inputs:-1]
    o_ref = refs[-1]

    @pl.when(pl.program_id(0) == 0)
    def _():
        o_ref[...] = jnp.zeros_like(o_ref)

    h = _apply_mlp([x[...] for x in x_refs], w0_refs, b0_ref, rest, num_layers)

    n_out, te = o_ref.shape[0], dst_ref.shape[1]
    node_ids = jax.lax.broadcasted_iota(jnp.int32, (n_out, te), 0)
    # Padded edge rows carry dst = -1 -> one-hot column is all zero, so the
    # (bias-propagated) garbage MLP rows of the padding contribute nothing.
    one_hot = (dst_ref[...] == node_ids).astype(jnp.bfloat16)
    o_ref[...] += jnp.dot(one_hot, h.astype(jnp.bfloat16),
                          preferred_element_type=jnp.float32)


def _node_path_kernel(*refs, n_dst_layers, n_feat_layers):
    """Per node-row tile: dst_fc(node_attr), feat_fc(node_feat) and the final
    fc over the (virtual) concat [dst_attr, dst_feat, agg], all fused."""
    attr_ref, feat_ref, agg_ref = refs[0], refs[1], refs[2]
    p = 3
    dst_refs = refs[p:p + 2 * n_dst_layers]
    p += 2 * n_dst_layers
    feat_refs = refs[p:p + 2 * n_feat_layers]
    p += 2 * n_feat_layers
    fc_refs = refs[p:p + 4]
    o_ref = refs[-1]

    a = _apply_mlp([attr_ref[...]], [dst_refs[0]], dst_refs[1], dst_refs[2:],
                   n_dst_layers)
    f = _apply_mlp([feat_ref[...]], [feat_refs[0]], feat_refs[1], feat_refs[2:],
                   n_feat_layers)
    # Final nn.Linear; the concat is fused by row-splitting its weight.
    out = _apply_mlp([a, f, agg_ref[...]], list(fc_refs[:3]), fc_refs[3], [], 1)
    o_ref[...] = out.astype(o_ref.dtype)


def _scatter_sum_kernel(dst_ref, feat_ref, o_ref):
    """Fallback tiled scatter(src_feat, dst, reduce='sum').

    One-hot built from a grid-invariant iota compared against the shifted
    (1, te) dst row (the '+ n0' per-element add is gone); bf16 one-hot/feature
    operands, f32 accumulation directly into the resident output block."""
    @pl.when(pl.program_id(1) == 0)
    def _():
        o_ref[...] = jnp.zeros_like(o_ref)

    tn, te = o_ref.shape[0], dst_ref.shape[1]
    dst_local = dst_ref[...] - pl.program_id(0) * tn          # (1, te), cheap
    node_ids = jax.lax.broadcasted_iota(jnp.int32, (tn, te), 0)
    one_hot = (dst_local == node_ids).astype(jnp.bfloat16)
    o_ref[...] += jnp.dot(one_hot, feat_ref[...].astype(jnp.bfloat16),
                          preferred_element_type=jnp.float32)


# --------------------------- operand/spec helpers ----------------------------

def _mlp_weight_operands(layers, split_sizes=None):
    """Full-block operands + BlockSpecs for an MLP's weights and biases.

    Weights are cast to bf16 (MXU-native; halves weight VMEM/HBM, which also
    halves the cost of double-buffering these constant-index blocks); biases
    stay f32.  If `split_sizes` is given, W0 is split row-wise so the layer-0
    input concat never materializes.
    """
    # TODO(synk): on v7x, pipeline_mode=pl.Buffered(1) on these constant-index
    # blocks would also drop the redundant second weight buffer.
    w0, b0 = layers[0]
    w0 = jnp.asarray(w0)
    if split_sizes is None:
        w0_slices = [w0]
    else:
        assert sum(split_sizes) == w0.shape[0], (split_sizes, w0.shape)
        offs = [0]
        for k in split_sizes:
            offs.append(offs[-1] + k)
        w0_slices = [w0[offs[i]:offs[i + 1], :] for i in range(len(split_sizes))]

    operands = [w.astype(jnp.bfloat16) for w in w0_slices]
    operands.append(jnp.asarray(b0, jnp.float32).reshape(1, -1))
    for w, b in layers[1:]:
        operands.append(jnp.asarray(w).astype(jnp.bfloat16))
        operands.append(jnp.asarray(b, jnp.float32).reshape(1, -1))
    specs = [pl.BlockSpec(tuple(int(d) for d in op.shape), lambda i: (0, 0))
             for op in operands]
    return operands, specs


# ------------------------------ Pallas wrappers ------------------------------

def fused_mlp(inputs, layers, *, tm=1024, out_dtype=jnp.float32):
    """y = MLP(concat(inputs, -1)) as a single row-tiled pallas_call."""
    inputs = [jnp.asarray(x) for x in inputs]
    num_inputs = len(inputs)
    num_layers = len(layers)
    m = inputs[0].shape[0]
    out_dim = int(layers[-1][0].shape[1])
    k_sizes = [int(x.shape[1]) for x in inputs]

    tm_eff, m_pad = _tile_rows_parallel(m, tm)
    inputs = [_pad_rows(x, m_pad) for x in inputs]

    w_ops, w_specs = _mlp_weight_operands(layers, split_sizes=k_sizes)
    operands = inputs + w_ops
    in_specs = ([pl.BlockSpec((tm_eff, k), lambda i: (i, 0)) for k in k_sizes]
                + w_specs)

    # TODO(synk): out_dim < 128 lanes means masked partial stores; packing
    # several row tiles into a 128-lane output slab would make stores dense.
    kernel = functools.partial(_fused_mlp_kernel,
                               num_inputs=num_inputs, num_layers=num_layers)
    out = pl.pallas_call(
        kernel,
        out_shape=jax.ShapeDtypeStruct((m_pad, out_dim), out_dtype),
        grid=(m_pad // tm_eff,),
        in_specs=in_specs,
        out_specs=pl.BlockSpec((tm_eff, out_dim), lambda i: (i, 0)),
        compiler_params=pltpu.CompilerParams(
            dimension_semantics=("parallel",),
            vmem_limit_bytes=_vmem_limit_bytes()),
    )(*operands)
    return out[:m] if m_pad != m else out


def _edge_mlp_scatter(src_inputs, dst, src_layers, num_nodes, *, te=1024):
    """agg[n] = sum_{e: dst[e]==n} srcMLP(concat(src_inputs)[e]) in ONE pass
    over the edges (messages never touch HBM)."""
    inputs = [jnp.asarray(x) for x in src_inputs]
    e_rows = inputs[0].shape[0]
    f_out = int(src_layers[-1][0].shape[1])
    k_sizes = [int(x.shape[1]) for x in inputs]
    num_layers = len(src_layers)

    te_eff, e_pad = _tile_rows_seq(e_rows, te)
    inputs = [_pad_rows(x, e_pad) for x in inputs]
    dst = jnp.asarray(dst, jnp.int32)
    if e_pad != e_rows:
        dst = jnp.pad(dst, (0, e_pad - e_rows), constant_values=-1)
    n_pad = _round_up(num_nodes, 8)

    w_ops, w_specs = _mlp_weight_operands(src_layers, split_sizes=k_sizes)
    operands = [dst.reshape(1, e_pad)] + inputs + w_ops
    in_specs = ([pl.BlockSpec((1, te_eff), lambda e: (0, e))]
                + [pl.BlockSpec((te_eff, k), lambda e: (e, 0)) for k in k_sizes]
                + w_specs)

    kernel = functools.partial(_edge_mlp_scatter_kernel,
                               num_inputs=len(inputs), num_layers=num_layers)
    out = pl.pallas_call(
        kernel,
        out_shape=jax.ShapeDtypeStruct((n_pad, f_out), jnp.float32),
        grid=(e_pad // te_eff,),
        in_specs=in_specs,
        # Constant output block index across the grid -> accumulator resident.
        out_specs=pl.BlockSpec((n_pad, f_out), lambda e: (0, 0)),
        compiler_params=pltpu.CompilerParams(
            dimension_semantics=("arbitrary",),
            vmem_limit_bytes=_vmem_limit_bytes()),
    )(*operands)
    return out[:num_nodes]


def _node_path(node_attr, node_feat, agg, dst_layers, feat_layers, fc_layers, *,
               tm=1024, out_dtype=jnp.float32):
    """out = fc(concat(dst_fc(node_attr), feat_fc(node_feat), agg)) fused."""
    node_attr = jnp.asarray(node_attr, jnp.float32)
    node_feat = jnp.asarray(node_feat, jnp.float32)
    agg = jnp.asarray(agg, jnp.float32)
    n = node_feat.shape[0]
    f_node = int(node_feat.shape[1])
    f_attr = int(node_attr.shape[1])
    out_dim = int(fc_layers[-1][0].shape[1])

    tm_eff, m_pad = _tile_rows_parallel(n, tm)
    node_attr = _pad_rows(node_attr, m_pad)
    node_feat = _pad_rows(node_feat, m_pad)
    agg = _pad_rows(agg, m_pad)

    dst_ops, dst_specs = _mlp_weight_operands(dst_layers)
    feat_ops, feat_specs = _mlp_weight_operands(feat_layers)
    fc_ops, fc_specs = _mlp_weight_operands(
        fc_layers, split_sizes=[f_node, f_node, f_node])

    operands = [node_attr, node_feat, agg] + dst_ops + feat_ops + fc_ops
    in_specs = ([pl.BlockSpec((tm_eff, f_attr), lambda i: (i, 0)),
                 pl.BlockSpec((tm_eff, f_node), lambda i: (i, 0)),
                 pl.BlockSpec((tm_eff, f_node), lambda i: (i, 0))]
                + dst_specs + feat_specs + fc_specs)

    kernel = functools.partial(_node_path_kernel,
                               n_dst_layers=len(dst_layers),
                               n_feat_layers=len(feat_layers))
    out = pl.pallas_call(
        kernel,
        out_shape=jax.ShapeDtypeStruct((m_pad, out_dim), out_dtype),
        grid=(m_pad // tm_eff,),
        in_specs=in_specs,
        out_specs=pl.BlockSpec((tm_eff, out_dim), lambda i: (i, 0)),
        compiler_params=pltpu.CompilerParams(
            dimension_semantics=("parallel",),
            vmem_limit_bytes=_vmem_limit_bytes()),
    )(*operands)
    return out[:n] if m_pad != n else out


def scatter_sum(src_feat, dst, num_nodes, *, tn=2048, te=1024):
    """Fallback: out[n] = sum_{e: dst[e]==n} src_feat[e] (tiled one-hot matmul)."""
    src_feat = jnp.asarray(src_feat)
    dst = jnp.asarray(dst, jnp.int32)
    e_rows, f = src_feat.shape

    tn_eff, n_pad = _tile_rows_parallel(num_nodes, tn)
    te_eff, e_pad = _tile_rows_seq(e_rows, te)
    if e_pad != e_rows:
        src_feat = _pad_rows(src_feat, e_pad)
        dst = jnp.pad(dst, (0, e_pad - e_rows), constant_values=-1)

    out = pl.pallas_call(
        _scatter_sum_kernel,
        out_shape=jax.ShapeDtypeStruct((n_pad, f), jnp.float32),
        grid=(n_pad // tn_eff, e_pad // te_eff),
        in_specs=[pl.BlockSpec((1, te_eff), lambda ni, ei: (0, ei)),
                  pl.BlockSpec((te_eff, f), lambda ni, ei: (ei, 0))],
        out_specs=pl.BlockSpec((tn_eff, f), lambda ni, ei: (ni, 0)),
        compiler_params=pltpu.CompilerParams(
            dimension_semantics=("parallel", "arbitrary"),
            vmem_limit_bytes=_vmem_limit_bytes()),
    )(dst.reshape(1, e_pad), src_feat)
    return out[:num_nodes]


# --------------------------- parameter handling -----------------------------

def init_linear_params(key, fan_in, fan_out):
    """Deterministic init mimicking nn.Linear's uniform(-1/sqrt(fan_in), ...)."""
    kw, kb = jax.random.split(key)
    bound = 1.0 / jnp.sqrt(jnp.float32(fan_in))
    w = jax.random.uniform(kw, (fan_in, fan_out), jnp.float32, -bound, bound)
    b = jax.random.uniform(kb, (fan_out,), jnp.float32, -bound, bound)
    return w, b


def init_mlp_params(key, in_dim, hidden_dims, out_dim):
    dims = [in_dim] + list(hidden_dims) + [out_dim]
    keys = jax.random.split(key, len(dims) - 1)
    return [init_linear_params(k, dims[i], dims[i + 1])
            for i, k in enumerate(keys)]


def init_gcn_params(key, node_feat_size, node_attr_size, edge_attr_size,
                    hidden_size):
    k_src, k_dst, k_feat, k_fc = jax.random.split(key, 4)
    hidden = [hidden_size, hidden_size * 2, hidden_size]
    return {
        "src_fc": init_mlp_params(
            k_src, node_feat_size + node_attr_size + edge_attr_size,
            hidden, node_feat_size),
        "dst_fc": init_mlp_params(k_dst, node_attr_size, hidden, node_feat_size),
        "feat_fc": init_mlp_params(k_feat, node_feat_size, hidden,
                                   node_feat_size),
        "fc": [init_linear_params(k_fc, node_feat_size * 3, node_feat_size)],
    }


# ------------------------------ GCN forward ---------------------------------

def gcn_layer_forward(params, edge_index, node_feat, node_attr, edge_attr, *,
                      force_tiled_scatter=False):
    src, dst = edge_index[0], edge_index[1]
    num_nodes = node_feat.shape[0]
    f_node = int(node_feat.shape[1])

    # Per-edge row gather stays in XLA; node tables are cast to bf16 first (the
    # kernel feeds the MXU in bf16 anyway) so the [E, *] gathered arrays and
    # their kernel reads are half-width.
    # TODO(synk): fuse the gather itself (scalar-prefetch DMA gather or a
    # VMEM-resident node table) to remove the [E, F] gathered arrays from HBM.
    nf_src = jnp.take(node_feat.astype(jnp.bfloat16), src, axis=0)
    na_src = jnp.take(node_attr.astype(jnp.bfloat16), src, axis=0)
    ea = jnp.asarray(edge_attr).astype(jnp.bfloat16)

    acc_bytes = _round_up(num_nodes, 8) * f_node * 4
    if (not force_tiled_scatter) and acc_bytes <= _FUSED_SCATTER_ACC_BYTES:
        # Main path: src_fc + scatter fused -> one pass over the edges.
        agg = _edge_mlp_scatter([nf_src, na_src, ea], dst,
                                params["src_fc"], num_nodes)
    else:
        # Fallback for very large N: standalone src_fc with bf16 output (halves
        # the [E, F] traffic the tiled scatter re-streams), then tiled scatter.
        src_feat = fused_mlp([nf_src, na_src, ea], params["src_fc"],
                             out_dtype=jnp.bfloat16)
        agg = scatter_sum(src_feat, dst, num_nodes)

    # Node path: dst_fc, feat_fc and the final fc fused into one kernel.
    return _node_path(node_attr, node_feat, agg,
                      params["dst_fc"], params["feat_fc"], params["fc"])


# -------------------------- pure-JAX reference -------------------------------

def _mlp_ref(layers, x):
    for i, (w, b) in enumerate(layers):
        x = x @ w + b
        if i < len(layers) - 1:
            x = jnp.maximum(x, 0.0)
    return x


def _gcn_ref(params, edge_index, node_feat, node_attr, edge_attr):
    src, dst = edge_index[0], edge_index[1]
    dst_attr = _mlp_ref(params["dst_fc"], node_attr)
    dst_feat = _mlp_ref(params["feat_fc"], node_feat)
    src_in = jnp.concatenate([node_feat[src], node_attr[src], edge_attr], -1)
    src_feat = _mlp_ref(params["src_fc"], src_in)
    agg = jnp.zeros((node_feat.shape[0], src_feat.shape[1]),
                    jnp.float32).at[dst].add(src_feat)
    cat = jnp.concatenate([dst_attr, dst_feat, agg], -1)
    return _mlp_ref(params["fc"], cat)


# ----------------------------------- main ------------------------------------

if __name__ == "__main__":
    # Small, deterministic example shapes (non-multiples of 8 exercise padding).
    N = 12           # nodes
    E = 30           # edges
    node_feat_size = 16
    node_attr_size = 8
    edge_attr_size = 4
    hidden_size = 32

    root = jax.random.PRNGKey(0)
    k_p, k_nf, k_na, k_ea, k_src, k_dst = jax.random.split(root, 6)

    params = init_gcn_params(k_p, node_feat_size, node_attr_size,
                             edge_attr_size, hidden_size)

    node_feat = jax.random.normal(k_nf, (N, node_feat_size), jnp.float32)
    node_attr = jax.random.normal(k_na, (N, node_attr_size), jnp.float32)
    edge_attr = jax.random.normal(k_ea, (E, edge_attr_size), jnp.float32)
    edge_index = jnp.stack([
        jax.random.randint(k_src, (E,), 0, N, dtype=jnp.int32),
        jax.random.randint(k_dst, (E,), 0, N, dtype=jnp.int32),
    ], axis=0)                                                   # [2, E]

    # Main (fully fused) path.
    out = jax.block_until_ready(
        gcn_layer_forward(params, edge_index, node_feat, node_attr, edge_attr))
    assert out.shape == (N, node_feat_size), out.shape
    assert out.dtype == jnp.float32, out.dtype

    # Fallback (standalone src_fc + tiled scatter) path.
    out_fb = jax.block_until_ready(
        gcn_layer_forward(params, edge_index, node_feat, node_attr, edge_attr,
                          force_tiled_scatter=True))

    # Check against the f32 reference. bf16 MXU operands introduce ~1% relative
    # error through the 4-layer MLPs, hence the 3e-2 tolerance.
    ref = jax.block_until_ready(
        _gcn_ref(params, edge_index, node_feat, node_attr, edge_attr))
    assert jnp.allclose(out, ref, rtol=3e-2, atol=3e-2), \
        float(jnp.max(jnp.abs(out - ref)))
    assert jnp.allclose(out_fb, ref, rtol=3e-2, atol=3e-2), \
        float(jnp.max(jnp.abs(out_fb - ref)))

    print("KERNEL_OK")
</pallas_src>

<mosaic_0001>
module attributes {stable_mosaic.version = 11 : i64} {
  func.func @_edge_mlp_scatter_kernel(%arg0: i32, %arg1: memref<1x32xi32, #tpu.memory_space<vmem>>, %arg2: memref<32x16xbf16, #tpu.memory_space<vmem>>, %arg3: memref<32x8xbf16, #tpu.memory_space<vmem>>, %arg4: memref<32x4xbf16, #tpu.memory_space<vmem>>, %arg5: memref<16x32xbf16, #tpu.memory_space<vmem>>, %arg6: memref<8x32xbf16, #tpu.memory_space<vmem>>, %arg7: memref<4x32xbf16, #tpu.memory_space<vmem>>, %arg8: memref<1x32xf32, #tpu.memory_space<vmem>>, %arg9: memref<32x64xbf16, #tpu.memory_space<vmem>>, %arg10: memref<1x64xf32, #tpu.memory_space<vmem>>, %arg11: memref<64x32xbf16, #tpu.memory_space<vmem>>, %arg12: memref<1x32xf32, #tpu.memory_space<vmem>>, %arg13: memref<32x16xbf16, #tpu.memory_space<vmem>>, %arg14: memref<1x16xf32, #tpu.memory_space<vmem>>, %arg15: memref<16x16xf32, #tpu.memory_space<vmem>>) attributes {dimension_semantics = [#tpu.dimension_semantics<arbitrary>], iteration_bounds = array<i64: 1>, scalar_prefetch = 0 : i64, scratch_operands = 0 : i64, tpu.core_type = #tpu.core_type<tc>, window_params = [{transform_indices = @transform_0, window_bounds = array<i64: 1, 32>}, {transform_indices = @transform_1, window_bounds = array<i64: 32, 16>}, {transform_indices = @transform_2, window_bounds = array<i64: 32, 8>}, {transform_indices = @transform_3, window_bounds = array<i64: 32, 4>}, {pipeline_mode = #tpu.pipeline_mode<synchronous>, transform_indices = @transform_4, window_bounds = array<i64: 16, 32>}, {pipeline_mode = #tpu.pipeline_mode<synchronous>, transform_indices = @transform_5, window_bounds = array<i64: 8, 32>}, {pipeline_mode = #tpu.pipeline_mode<synchronous>, transform_indices = @transform_6, window_bounds = array<i64: 4, 32>}, {pipeline_mode = #tpu.pipeline_mode<synchronous>, transform_indices = @transform_7, window_bounds = array<i64: 1, 32>}, {pipeline_mode = #tpu.pipeline_mode<synchronous>, transform_indices = @transform_8, window_bounds = array<i64: 32, 64>}, {pipeline_mode = #tpu.pipeline_mode<synchronous>, transform_indices = @transform_9, window_bounds = array<i64: 1, 64>}, {pipeline_mode = #tpu.pipeline_mode<synchronous>, transform_indices = @transform_10, window_bounds = array<i64: 64, 32>}, {pipeline_mode = #tpu.pipeline_mode<synchronous>, transform_indices = @transform_11, window_bounds = array<i64: 1, 32>}, {pipeline_mode = #tpu.pipeline_mode<synchronous>, transform_indices = @transform_12, window_bounds = array<i64: 32, 16>}, {pipeline_mode = #tpu.pipeline_mode<synchronous>, transform_indices = @transform_13, window_bounds = array<i64: 1, 16>}, {pipeline_mode = #tpu.pipeline_mode<synchronous>, transform_indices = @transform_14, window_bounds = array<i64: 16, 16>}]} {
    %c0_i32 = arith.constant 0 : i32
    %0 = arith.cmpi eq, %arg0, %c0_i32 : i32
    %1 = arith.extui %0 : i1 to i32
    %c0_i32_0 = arith.constant 0 : i32
    %2 = arith.cmpi ne, %1, %c0_i32_0 : i32
    scf.if %2 {
      %cst_41 = arith.constant 0.000000e+00 : f32
      %53 = vector.broadcast %cst_41 : f32 to vector<16x16xf32>
      %c0_42 = arith.constant 0 : index
      %c0_43 = arith.constant 0 : index
      %54 = vector.load %arg15[%c0_42, %c0_43] : memref<16x16xf32, #tpu.memory_space<vmem>>, vector<16x16xf32>
      tpu.vector_store %arg15[%c0_42, %c0_43], %53 {strides = array<i32>} : memref<16x16xf32, #tpu.memory_space<vmem>>, vector<16x16xf32>,
    } else {
    }
    %c0 = arith.constant 0 : index
    %c0_1 = arith.constant 0 : index
    %3 = vector.load %arg2[%c0, %c0_1] : memref<32x16xbf16, #tpu.memory_space<vmem>>, vector<32x16xbf16>
    %c0_2 = arith.constant 0 : index
    %c0_3 = arith.constant 0 : index
    %4 = vector.load %arg3[%c0_2, %c0_3] : memref<32x8xbf16, #tpu.memory_space<vmem>>, vector<32x8xbf16>
    %c0_4 = arith.constant 0 : index
    %c0_5 = arith.constant 0 : index
    %5 = vector.load %arg4[%c0_4, %c0_5] : memref<32x4xbf16, #tpu.memory_space<vmem>>, vector<32x4xbf16>
    %c0_6 = arith.constant 0 : index
    %c0_7 = arith.constant 0 : index
    %6 = vector.load %arg5[%c0_6, %c0_7] : memref<16x32xbf16, #tpu.memory_space<vmem>>, vector<16x32xbf16>
    %cst = arith.constant dense<0.000000e+00> : vector<32x32xf32>
    %7 = tpu.matmul %3, %6, %cst {dimension_numbers = #tpu.dot_dimension_numbers<[1], [0], [0], [1], [0, 0, 1, 1], [], []>} : vector<32x16xbf16>, vector<16x32xbf16>, vector<32x32xf32> -> vector<32x32xf32>
    %c0_8 = arith.constant 0 : index
    %c0_9 = arith.constant 0 : index
    %8 = vector.load %arg6[%c0_8, %c0_9] : memref<8x32xbf16, #tpu.memory_space<vmem>>, vector<8x32xbf16>
    %cst_10 = arith.constant dense<0.000000e+00> : vector<32x32xf32>
    %9 = tpu.matmul %4, %8, %cst_10 {dimension_numbers = #tpu.dot_dimension_numbers<[1], [0], [0], [1], [0, 0, 1, 1], [], []>} : vector<32x8xbf16>, vector<8x32xbf16>, vector<32x32xf32> -> vector<32x32xf32>
    %10 = arith.addf %7, %9 : vector<32x32xf32>
    %c0_11 = arith.constant 0 : index
    %c0_12 = arith.constant 0 : index
    %11 = vector.load %arg7[%c0_11, %c0_12] : memref<4x32xbf16, #tpu.memory_space<vmem>>, vector<4x32xbf16>
    %cst_13 = arith.constant dense<0.000000e+00> : vector<32x32xf32>
    %12 = tpu.matmul %5, %11, %cst_13 {dimension_numbers = #tpu.dot_dimension_numbers<[1], [0], [0], [1], [0, 0, 1, 1], [], []>} : vector<32x4xbf16>, vector<4x32xbf16>, vector<32x32xf32> -> vector<32x32xf32>
    %13 = arith.addf %10, %12 : vector<32x32xf32>
    %c0_14 = arith.constant 0 : index
    %c0_15 = arith.constant 0 : index
    %14 = vector.load %arg8[%c0_14, %c0_15] : memref<1x32xf32, #tpu.memory_space<vmem>>, vector<1x32xf32>
    %15 = vector.broadcast %14 : vector<1x32xf32> to vector<32x32xf32>
    %16 = arith.addf %13, %15 : vector<32x32xf32>
    %cst_16 = arith.constant 0.000000e+00 : f32
    %17 = vector.broadcast %cst_16 : f32 to vector<32x32xf32>
    %18 = arith.maximumf %16, %17 : vector<32x32xf32>
    %19 = arith.truncf %18 : vector<32x32xf32> to vector<32x32xbf16>
    %c0_17 = arith.constant 0 : index
    %c0_18 = arith.constant 0 : index
    %20 = vector.load %arg9[%c0_17, %c0_18] : memref<32x64xbf16, #tpu.memory_space<vmem>>, vector<32x64xbf16>
    %cst_19 = arith.constant dense<0.000000e+00> : vector<32x64xf32>
    %21 = tpu.matmul %19, %20, %cst_19 {dimension_numbers = #tpu.dot_dimension_numbers<[1], [0], [0], [1], [0, 0, 1, 1], [], []>} : vector<32x32xbf16>, vector<32x64xbf16>, vector<32x64xf32> -> vector<32x64xf32>
    %c0_20 = arith.constant 0 : index
    %c0_21 = arith.constant 0 : index
    %22 = vector.load %arg10[%c0_20, %c0_21] : memref<1x64xf32, #tpu.memory_space<vmem>>, vector<1x64xf32>
    %23 = vector.broadcast %22 : vector<1x64xf32> to vector<32x64xf32>
    %24 = arith.addf %21, %23 : vector<32x64xf32>
    %cst_22 = arith.constant 0.000000e+00 : f32
    %25 = vector.broadcast %cst_22 : f32 to vector<32x64xf32>
    %26 = arith.maximumf %24, %25 : vector<32x64xf32>
    %27 = arith.truncf %26 : vector<32x64xf32> to vector<32x64xbf16>
    %c0_23 = arith.constant 0 : index
    %c0_24 = arith.constant 0 : index
    %28 = vector.load %arg11[%c0_23, %c0_24] : memref<64x32xbf16, #tpu.memory_space<vmem>>, vector<64x32xbf16>
    %cst_25 = arith.constant dense<0.000000e+00> : vector<32x32xf32>
    %29 = tpu.matmul %27, %28, %cst_25 {dimension_numbers = #tpu.dot_dimension_numbers<[1], [0], [0], [1], [0, 0, 1, 1], [], []>} : vector<32x64xbf16>, vector<64x32xbf16>, vector<32x32xf32> -> vector<32x32xf32>
    %c0_26 = arith.constant 0 : index
    %c0_27 = arith.constant 0 : index
    %30 = vector.load %arg12[%c0_26, %c0_27] : memref<1x32xf32, #tpu.memory_space<vmem>>, vector<1x32xf32>
    %31 = vector.broadcast %30 : vector<1x32xf32> to vector<32x32xf32>
    %32 = arith.addf %29, %31 : vector<32x32xf32>
    %cst_28 = arith.constant 0.000000e+00 : f32
    %33 = vector.broadcast %cst_28 : f32 to vector<32x32xf32>
    %34 = arith.maximumf %32, %33 : vector<32x32xf32>
    %35 = arith.truncf %34 : vector<32x32xf32> to vector<32x32xbf16>
    %c0_29 = arith.constant 0 : index
    %c0_30 = arith.constant 0 : index
    %36 = vector.load %arg13[%c0_29, %c0_30] : memref<32x16xbf16, #tpu.memory_space<vmem>>, vector<32x16xbf16>
    %cst_31 = arith.constant dense<0.000000e+00> : vector<32x16xf32>
    %37 = tpu.matmul %35, %36, %cst_31 {dimension_numbers = #tpu.dot_dimension_numbers<[1], [0], [0], [1], [0, 0, 1, 1], [], []>} : vector<32x32xbf16>, vector<32x16xbf16>, vector<32x16xf32> -> vector<32x16xf32>
    %c0_32 = arith.constant 0 : index
    %c0_33 = arith.constant 0 : index
    %38 = vector.load %arg14[%c0_32, %c0_33] : memref<1x16xf32, #tpu.memory_space<vmem>>, vector<1x16xf32>
    %39 = vector.broadcast %38 : vector<1x16xf32> to vector<32x16xf32>
    %40 = arith.addf %37, %39 : vector<32x16xf32>
    %41 = tpu.iota {dimensions = array<i32: 0>} : vector<16x32xi32>
    %c0_34 = arith.constant 0 : index
    %c0_35 = arith.constant 0 : index
    %42 = vector.load %arg1[%c0_34, %c0_35] : memref<1x32xi32, #tpu.memory_space<vmem>>, vector<1x32xi32>
    %43 = vector.broadcast %42 : vector<1x32xi32> to vector<16x32xi32>
    %44 = arith.cmpi eq, %43, %41 : vector<16x32xi32>
    %45 = arith.extui %44 : vector<16x32xi1> to vector<16x32xi32>
    %46 = arith.sitofp %45 : vector<16x32xi32> to vector<16x32xf32>
    %47 = arith.truncf %46 : vector<16x32xf32> to vector<16x32xbf16>
    %c0_36 = arith.constant 0 : index
    %c0_37 = arith.constant 0 : index
    %48 = vector.load %arg15[%c0_36, %c0_37] : memref<16x16xf32, #tpu.memory_space<vmem>>, vector<16x16xf32>
    %49 = arith.truncf %40 : vector<32x16xf32> to vector<32x16xbf16>
    %cst_38 = arith.constant dense<0.000000e+00> : vector<16x16xf32>
    %50 = tpu.matmul %47, %49, %cst_38 {dimension_numbers = #tpu.dot_dimension_numbers<[1], [0], [0], [1], [0, 0, 1, 1], [], []>} : vector<16x32xbf16>, vector<32x16xbf16>, vector<16x16xf32> -> vector<16x16xf32>
    %51 = arith.addf %48, %50 : vector<16x16xf32>
    %c0_39 = arith.constant 0 : index
    %c0_40 = arith.constant 0 : index
    %52 = vector.load %arg15[%c0_39, %c0_40] : memref<16x16xf32, #tpu.memory_space<vmem>>, vector<16x16xf32>
    tpu.vector_store %arg15[%c0_39, %c0_40], %51 {strides = array<i32>} : memref<16x16xf32, #tpu.memory_space<vmem>>, vector<16x16xf32>,
    return
  }
  func.func @transform_0(%arg0: i32) -> (i32, i32) {
    %c0_i32 = arith.constant 0 : i32
    %c0_i32_0 = arith.constant 0 : i32
    return %c0_i32, %arg0 : i32, i32
  }
  func.func @transform_1(%arg0: i32) -> (i32, i32) {
    %c0_i32 = arith.constant 0 : i32
    %c0_i32_0 = arith.constant 0 : i32
    return %arg0, %c0_i32 : i32, i32
  }
  func.func @transform_2(%arg0: i32) -> (i32, i32) {
    %c0_i32 = arith.constant 0 : i32
    %c0_i32_0 = arith.constant 0 : i32
    return %arg0, %c0_i32 : i32, i32
  }
  func.func @transform_3(%arg0: i32) -> (i32, i32) {
    %c0_i32 = arith.constant 0 : i32
    %c0_i32_0 = arith.constant 0 : i32
    return %arg0, %c0_i32 : i32, i32
  }
  func.func @transform_4(%arg0: i32) -> (i32, i32) {
    %c0_i32 = arith.constant 0 : i32
    %c0_i32_0 = arith.constant 0 : i32
    %c0_i32_1 = arith.constant 0 : i32
    return %c0_i32, %c0_i32_0 : i32, i32
  }
  func.func @transform_5(%arg0: i32) -> (i32, i32) {
    %c0_i32 = arith.constant 0 : i32
    %c0_i32_0 = arith.constant 0 : i32
    %c0_i32_1 = arith.constant 0 : i32
    return %c0_i32, %c0_i32_0 : i32, i32
  }
  func.func @transform_6(%arg0: i32) -> (i32, i32) {
    %c0_i32 = arith.constant 0 : i32
    %c0_i32_0 = arith.constant 0 : i32
    %c0_i32_1 = arith.constant 0 : i32
    return %c0_i32, %c0_i32_0 : i32, i32
  }
  func.func @transform_7(%arg0: i32) -> (i32, i32) {
    %c0_i32 = arith.constant 0 : i32
    %c0_i32_0 = arith.constant 0 : i32
    %c0_i32_1 = arith.constant 0 : i32
    return %c0_i32, %c0_i32_0 : i32, i32
  }
  func.func @transform_8(%arg0: i32) -> (i32, i32) {
    %c0_i32 = arith.constant 0 : i32
    %c0_i32_0 = arith.constant 0 : i32
    %c0_i32_1 = arith.constant 0 : i32
    return %c0_i32, %c0_i32_0 : i32, i32
  }
  func.func @transform_9(%arg0: i32) -> (i32, i32) {
    %c0_i32 = arith.constant 0 : i32
    %c0_i32_0 = arith.constant 0 : i32
    %c0_i32_1 = arith.constant 0 : i32
    return %c0_i32, %c0_i32_0 : i32, i32
  }
  func.func @transform_10(%arg0: i32) -> (i32, i32) {
    %c0_i32 = arith.constant 0 : i32
    %c0_i32_0 = arith.constant 0 : i32
    %c0_i32_1 = arith.constant 0 : i32
    return %c0_i32, %c0_i32_0 : i32, i32
  }
  func.func @transform_11(%arg0: i32) -> (i32, i32) {
    %c0_i32 = arith.constant 0 : i32
    %c0_i32_0 = arith.constant 0 : i32
    %c0_i32_1 = arith.constant 0 : i32
    return %c0_i32, %c0_i32_0 : i32, i32
  }
  func.func @transform_12(%arg0: i32) -> (i32, i32) {
    %c0_i32 = arith.constant 0 : i32
    %c0_i32_0 = arith.constant 0 : i32
    %c0_i32_1 = arith.constant 0 : i32
    return %c0_i32, %c0_i32_0 : i32, i32
  }
  func.func @transform_13(%arg0: i32) -> (i32, i32) {
    %c0_i32 = arith.constant 0 : i32
    %c0_i32_0 = arith.constant 0 : i32
    %c0_i32_1 = arith.constant 0 : i32
    return %c0_i32, %c0_i32_0 : i32, i32
  }
  func.func @transform_14(%arg0: i32) -> (i32, i32) {
    %c0_i32 = arith.constant 0 : i32
    %c0_i32_0 = arith.constant 0 : i32
    %c0_i32_1 = arith.constant 0 : i32
    return %c0_i32, %c0_i32_0 : i32, i32
  }
}

</mosaic_0001>

<llo_original>
// kernel: tpu_custom_call.1
$region0: #{tpu_custom_call.1}
  #allocation0 [shape = 'u32[]', space=smem, size = 0x4, offset = 0x4, fixed_abs, tag = 'smem constant byte address 0x4 - core index']
  #allocation1 [shape = 'u32[144,128]{1,0:T(1,128)}', space=vmem, size = 0x12000, scoped, tag = 'internal scratch']
  %s0 = inlined_call_operand.vmem [shape: s32[1,32], index: 0, kind: input, shape index: {}]
  %s1 = inlined_call_operand.vmem [shape: bf16[32,16], index: 1, kind: input, shape index: {}]
  %s2 = inlined_call_operand.vmem [shape: bf16[32,8], index: 2, kind: input, shape index: {}]
  %s3 = inlined_call_operand.vmem [shape: bf16[32,4], index: 3, kind: input, shape index: {}]
  %s4 = inlined_call_operand.vmem [shape: bf16[16,32], index: 4, kind: input, shape index: {}]
  %s5 = inlined_call_operand.vmem [shape: bf16[8,32], index: 5, kind: input, shape index: {}]
  %s6 = inlined_call_operand.vmem [shape: bf16[4,32], index: 6, kind: input, shape index: {}]
  %s7 = inlined_call_operand.vmem [shape: f32[1,32], index: 7, kind: input, shape index: {}]
  %s8 = inlined_call_operand.vmem [shape: bf16[32,64], index: 8, kind: input, shape index: {}]
  %s9 = inlined_call_operand.vmem [shape: f32[1,64], index: 9, kind: input, shape index: {}]
  %s10 = inlined_call_operand.vmem [shape: bf16[64,32], index: 10, kind: input, shape index: {}]
  %s11 = inlined_call_operand.vmem [shape: f32[1,32], index: 11, kind: input, shape index: {}]
  %s12 = inlined_call_operand.vmem [shape: bf16[32,16], index: 12, kind: input, shape index: {}]
  %s13 = inlined_call_operand.vmem [shape: f32[1,16], index: 13, kind: input, shape index: {}]
  %s14 = inlined_call_operand.hbm [shape: f32[16,16], index: 14, kind: output, shape index: {}]
  %s15 = sld [smem:[#allocation0]]
  $region70: #{tpu_custom_call.1} parent=0
    _
  %s17 = ssub.s32 1, %s15
  %s18 = scalar_select 0, %s17, %s15
  $region1: #{tpu_custom_call.1} parent=0
    #allocation2 [shape = 'u8[8192]{0}', space=vmem, size = 0x2000, scoped, tag = 'output window, operand 0, single buffered']
    #allocation3 [shape = 's32[1]{0}', space=sflag, size = 0x4, scoped, tag = 'scoped memory for tpu_custom_call.1']
    %19 = vsyncpa [#allocation3], 0
    // Predicated region
    $region2: #{tpu_custom_call.1} parent=1 // pred_check
      _
    $region3: #{tpu_custom_call.1} parent=1 // pred_check_branch
      %21 = sbr.rel (0) target = $region5
    $region4: #{tpu_custom_call.1} parent=1 // pred_region
      _
    $region5: #{tpu_custom_call.1} parent=1 // pred_fallthru
      _
    // Predicated region
    $region6: #{tpu_custom_call.1} parent=1 // pred_check
      _
    $region7: #{tpu_custom_call.1} parent=1 // pred_check_branch
      %23 = sbr.rel (0) target = $region9
    $region8: #{tpu_custom_call.1} parent=1 // pred_region
      _
    $region9: #{tpu_custom_call.1} parent=1 // pred_fallthru
      _
    // Predicated region
    $region10: #{tpu_custom_call.1} parent=1 // pred_check
      _
    $region11: #{tpu_custom_call.1} parent=1 // pred_check_branch
      %25 = sbr.rel (0) target = $region13
    $region12: #{tpu_custom_call.1} parent=1 // pred_region
      _
    $region13: #{tpu_custom_call.1} parent=1 // pred_fallthru
      _
    // Predicated region
    $region14: #{tpu_custom_call.1} parent=1 // pred_check
      _
    $region15: #{tpu_custom_call.1} parent=1 // pred_check_branch
      %27 = sbr.rel (0) target = $region17
    $region16: #{tpu_custom_call.1} parent=1 // pred_region
      _
    $region17: #{tpu_custom_call.1} parent=1 // pred_fallthru
      _
    // Predicated region
    $region18: #{tpu_custom_call.1} parent=1 // pred_check
      _
    $region19: #{tpu_custom_call.1} parent=1 // pred_check_branch
      %29 = sbr.rel (0) target = $region21
    $region20: #{tpu_custom_call.1} parent=1 // pred_region
      _
    $region21: #{tpu_custom_call.1} parent=1 // pred_fallthru
      _
    // Predicated region
    $region22: #{tpu_custom_call.1} parent=1 // pred_check
      _
    $region23: #{tpu_custom_call.1} parent=1 // pred_check_branch
      %31 = sbr.rel (0) target = $region25
    $region24: #{tpu_custom_call.1} parent=1 // pred_region
      _
    $region25: #{tpu_custom_call.1} parent=1 // pred_fallthru
      _
    // Predicated region
    $region26: #{tpu_custom_call.1} parent=1 // pred_check
      _
    $region27: #{tpu_custom_call.1} parent=1 // pred_check_branch
      %33 = sbr.rel (0) target = $region29
    $region28: #{tpu_custom_call.1} parent=1 // pred_region
      _
    $region29: #{tpu_custom_call.1} parent=1 // pred_fallthru
      _
    // Predicated region
    $region30: #{tpu_custom_call.1} parent=1 // pred_check
      _
    $region31: #{tpu_custom_call.1} parent=1 // pred_check_branch
      %35 = sbr.rel (0) target = $region33
    $region32: #{tpu_custom_call.1} parent=1 // pred_region
      _
    $region33: #{tpu_custom_call.1} parent=1 // pred_fallthru
      _
    // Predicated region
    $region34: #{tpu_custom_call.1} parent=1 // pred_check
      _
    $region35: #{tpu_custom_call.1} parent=1 // pred_check_branch
      %37 = sbr.rel (0) target = $region37
    $region36: #{tpu_custom_call.1} parent=1 // pred_region
      _
    $region37: #{tpu_custom_call.1} parent=1 // pred_fallthru
      _
    // Predicated region
    $region38: #{tpu_custom_call.1} parent=1 // pred_check
      _
    $region39: #{tpu_custom_call.1} parent=1 // pred_check_branch
      %39 = sbr.rel (0) target = $region41
    $region40: #{tpu_custom_call.1} parent=1 // pred_region
      _
    $region41: #{tpu_custom_call.1} parent=1 // pred_fallthru
      _
    // Predicated region
    $region42: #{tpu_custom_call.1} parent=1 // pred_check
      _
    $region43: #{tpu_custom_call.1} parent=1 // pred_check_branch
      %41 = sbr.rel (0) target = $region45
    $region44: #{tpu_custom_call.1} parent=1 // pred_region
      _
    $region45: #{tpu_custom_call.1} parent=1 // pred_fallthru
      _
    // Predicated region
    $region46: #{tpu_custom_call.1} parent=1 // pred_check
      _
    $region47: #{tpu_custom_call.1} parent=1 // pred_check_branch
      %43 = sbr.rel (0) target = $region49
    $region48: #{tpu_custom_call.1} parent=1 // pred_region
      _
    $region49: #{tpu_custom_call.1} parent=1 // pred_fallthru
      _
    // Predicated region
    $region50: #{tpu_custom_call.1} parent=1 // pred_check
      _
    $region51: #{tpu_custom_call.1} parent=1 // pred_check_branch
      %45 = sbr.rel (0) target = $region53
    $region52: #{tpu_custom_call.1} parent=1 // pred_region
      _
    $region53: #{tpu_custom_call.1} parent=1 // pred_fallthru
      _
    // Predicated region
    $region54: #{tpu_custom_call.1} parent=1 // pred_check
      _
    $region55: #{tpu_custom_call.1} parent=1 // pred_check_branch
      %47 = sbr.rel (0) target = $region57
    $region56: #{tpu_custom_call.1} parent=1 // pred_region
      _
    $region57: #{tpu_custom_call.1} parent=1 // pred_fallthru
      _
    %p49 = scmp.eq.s32.totalorder 0, 0
    // Predicated region
    $region58: #{tpu_custom_call.1} parent=1 // pred_check
      %p50 = pneg %p49
    $region59: #{tpu_custom_call.1} parent=1 // pred_check_branch
      %52 = sbr.rel (%p50) target = $region61
    $region60: #{tpu_custom_call.1} parent=1 // pred_region
      %vm53 = vcmask 130048
      %54 = vst.msk [vmem:[#allocation2] sm:$0xff] %vm53, 0.0
      %55 = vst.msk [vmem:[#allocation2 + $0x8] sm:$0xff] %vm53, 0.0
    $region61: #{tpu_custom_call.1} parent=1 // pred_fallthru
      _
    %v56 = vld [vmem:[%s1] sm:$0xf]
    %v57 = vld [vmem:[%s1 + $0x4] sm:$0xf]
    %v58 = vld [vmem:[%s1 + $0x8] sm:$0xf]
    %v59 = vld [vmem:[%s1 + $0xc] sm:$0xf]
    %v60 = vld [vmem:[%s2] sm:$0xf]
    %v61 = vld [vmem:[%s2 + $0x4] sm:$0xf]
    %v62 = vld [vmem:[%s2 + $0x8] sm:$0xf]
    %v63 = vld [vmem:[%s2 + $0xc] sm:$0xf]
    %v64 = vld [vmem:[%s3] sm:$0xf]
    %v65 = vld [vmem:[%s3 + $0x4] sm:$0xf]
    %v66 = vld [vmem:[%s3 + $0x8] sm:$0xf]
    %v67 = vld [vmem:[%s3 + $0xc] sm:$0xf]
    %v68 = vld [vmem:[%s4] sm:$0xf]
    %v69 = vld [vmem:[%s4 + $0x4] sm:$0xf]
    %v70 = vld [vmem:[%s5] sm:$0xf]
    %v75 = vunpack.c.l.b16 %v60
    %v76 = vunpack.c.l.b16 %v61
    %v77 = vunpack.c.l.b16 %v62
    %v78 = vunpack.c.l.b16 %v63
    %v79 = vpack.c.b16 %v76, %v75
    %v80 = vpack.c.b16 %v78, %v77
    %vm81 = vcmask 64512
    %v83 = vsel %vm81, %v79, 0
    %v86 = vsel %vm81, %v80, 0
    %vm88 = vcmask 1043456
    %v90 = vsel %vm88, %v70, 0
    %92 = vmatprep.subr.bf16.mxu0 0
    %93 = vmatpush1.bf16.msra.mxu0 0
    %94 = vmatprep.subr.bf16.mxu0 0
    %95 = vmatpush1.bf16.msra.mxu0 0
    %96 = vmatprep.subr.bf16.mxu0 0
    %97 = vmatpush1.bf16.msra.mxu0 0
    %98 = vmatprep.subr.bf16.mxu0 0
    %99 = vmatpush1.bf16.msra.mxu0 0
    %100 = vmatprep.subr.bf16.mxu0 0
    %101 = vmatpush1.bf16.msra.mxu0 0
    %102 = vmatprep.subr.bf16.mxu0 0
    %103 = vmatpush1.bf16.msra.mxu0 0
    %104 = vmatprep.subr.bf16.mxu0 0
    %105 = vmatpush1.bf16.msra.mxu0 0
    %106 = vmatprep.subr.bf16.mxu0 0
    %107 = vmatpush1.bf16.msra.mxu0 %v90
    %108 = vmatprep.subr.bf16.mxu0 0
    %109 = vmatpush2.bf16.msra.mxu0 0
    %110 = vmatprep.subr.bf16.mxu0 0
    %111 = vmatpush2.bf16.msra.mxu0 0
    %112 = vmatprep.subr.bf16.mxu0 0
    %113 = vmatpush2.bf16.msra.mxu0 0
    %114 = vmatprep.subr.bf16.mxu0 0
    %115 = vmatpush2.bf16.msra.mxu0 0
    %116 = vmatprep.subr.bf16.mxu0 0
    %117 = vmatpush2.bf16.msra.mxu0 0
    %118 = vmatprep.subr.bf16.mxu0 0
    %119 = vmatpush2.bf16.msra.mxu0 0
    %120 = vmatprep.subr.bf16.mxu0 0
    %121 = vmatpush2.bf16.msra.mxu0 0
    %122 = vmatprep.subr.bf16.mxu0 0
    %123 = vmatpush2.bf16.msra.mxu0 0
    %124 = vmatprep.mubr.bf16.mxu0 0
    %125 = vmatmul.mubr.bf16.gmra.mxu0 %v83
    %v126 = vpop.f32.mrf.mxu0
    %v127 = vadd.f32 0.0, %v126
    %v128 = vpop.f32.mrf.mxu0
    %v129 = vpop.f32.mrf.mxu0
    %v130 = vadd.f32 0.0, %v129
    %v131 = vpop.f32.mrf.mxu0
    %132 = vmatprep.mubr.bf16.mxu0 0
    %133 = vmatmul.mubr.bf16.gmra.mxu0 %v86
    %v134 = vpop.f32.mrf.mxu0
    %v135 = vadd.f32 0.0, %v134
    %v136 = vpop.f32.mrf.mxu0
    %v137 = vpop.f32.mrf.mxu0
    %v138 = vadd.f32 0.0, %v137
    %v139 = vpop.f32.mrf.mxu0
    %140 = vdwg.mxu0
    %v145 = vunpack.c.l.b16 %v56
    %v146 = vunpack.c.l.b16 %v57
    %v147 = vunpack.c.l.b16 %v58
    %v148 = vunpack.c.l.b16 %v59
    %v149 = vpack.c.b16 %v146, %v145
    %v150 = vpack.c.b16 %v148, %v147
    %v153 = vunpack.c.l.b16 %v68
    %v154 = vunpack.c.l.b16 %v69
    %v155 = vpack.c.b16 %v154, %v153
    %vm157 = vcmask 130048
    %v159 = vsel %vm157, %v149, 0
    %v162 = vsel %vm157, %v150, 0
    %164 = vmatprep.subr.bf16.mxu0 0
    %165 = vmatpush1.bf16.msra.mxu0 0
    %166 = vmatprep.subr.bf16.mxu0 0
    %167 = vmatpush1.bf16.msra.mxu0 0
    %168 = vmatprep.subr.bf16.mxu0 0
    %169 = vmatpush1.bf16.msra.mxu0 0
    %170 = vmatprep.subr.bf16.mxu0 0
    %171 = vmatpush1.bf16.msra.mxu0 0
    %172 = vmatprep.subr.bf16.mxu0 0
    %173 = vmatpush1.bf16.msra.mxu0 0
    %174 = vmatprep.subr.bf16.mxu0 0
    %175 = vmatpush1.bf16.msra.mxu0 0
    %176 = vmatprep.subr.bf16.mxu0 0
    %177 = vmatpush1.bf16.msra.mxu0 0
    %178 = vmatprep.subr.bf16.mxu0 0
    %179 = vmatpush1.bf16.msra.mxu0 %v155
    %180 = vmatprep.subr.bf16.mxu0 0
    %181 = vmatpush2.bf16.msra.mxu0 0
    %182 = vmatprep.subr.bf16.mxu0 0
    %183 = vmatpush2.bf16.msra.mxu0 0
    %184 = vmatprep.subr.bf16.mxu0 0
    %185 = vmatpush2.bf16.msra.mxu0 0
    %186 = vmatprep.subr.bf16.mxu0 0
    %187 = vmatpush2.bf16.msra.mxu0 0
    %188 = vmatprep.subr.bf16.mxu0 0
    %189 = vmatpush2.bf16.msra.mxu0 0
    %190 = vmatprep.subr.bf16.mxu0 0
    %191 = vmatpush2.bf16.msra.mxu0 0
    %192 = vmatprep.subr.bf16.mxu0 0
    %193 = vmatpush2.bf16.msra.mxu0 0
    %194 = vmatprep.subr.bf16.mxu0 0
    %195 = vmatpush2.bf16.msra.mxu0 0
    %196 = vmatprep.mubr.bf16.mxu0 0
    %197 = vmatmul.mubr.bf16.gmra.mxu0 %v159
    %v198 = vpop.f32.mrf.mxu0
    %v199 = vadd.f32 %v127, %v198
    %v200 = vpop.f32.mrf.mxu0
    %v201 = vpop.f32.mrf.mxu0
    %v202 = vadd.f32 %v130, %v201
    %v203 = vpop.f32.mrf.mxu0
    %204 = vmatprep.mubr.bf16.mxu0 0
    %205 = vmatmul.mubr.bf16.gmra.mxu0 %v162
    %v206 = vpop.f32.mrf.mxu0
    %v207 = vadd.f32 %v135, %v206
    %v208 = vpop.f32.mrf.mxu0
    %v209 = vpop.f32.mrf.mxu0
    %v210 = vadd.f32 %v138, %v209
    %v211 = vpop.f32.mrf.mxu0
    %212 = vdwg.mxu0
    %v213 = vld [vmem:[%s6] sm:$0x3]
    %v218 = vunpack.c.l.b16 %v64
    %v219 = vunpack.c.l.b16 %v65
    %v220 = vunpack.c.l.b16 %v66
    %v221 = vunpack.c.l.b16 %v67
    %v222 = vpack.c.b16 %v219, %v218
    %v223 = vpack.c.b16 %v221, %v220
    %vm224 = vcmask 31744
    %v226 = vsel %vm224, %v222, 0
    %v229 = vsel %vm224, %v223, 0
    %vm231 = vcmask 1041408
    %v233 = vsel %vm231, %v213, 0
    %235 = vmatprep.subr.bf16.mxu0 0
    %236 = vmatpush1.bf16.msra.mxu0 0
    %237 = vmatprep.subr.bf16.mxu0 0
    %238 = vmatpush1.bf16.msra.mxu0 0
    %239 = vmatprep.subr.bf16.mxu0 0
    %240 = vmatpush1.bf16.msra.mxu0 0
    %241 = vmatprep.subr.bf16.mxu0 0
    %242 = vmatpush1.bf16.msra.mxu0 0
    %243 = vmatprep.subr.bf16.mxu0 0
    %244 = vmatpush1.bf16.msra.mxu0 0
    %245 = vmatprep.subr.bf16.mxu0 0
    %246 = vmatpush1.bf16.msra.mxu0 0
    %247 = vmatprep.subr.bf16.mxu0 0
    %248 = vmatpush1.bf16.msra.mxu0 0
    %249 = vmatprep.subr.bf16.mxu0 0
    %250 = vmatpush1.bf16.msra.mxu0 %v233
    %251 = vmatprep.subr.bf16.mxu0 0
    %252 = vmatpush2.bf16.msra.mxu0 0
    %253 = vmatprep.subr.bf16.mxu0 0
    %254 = vmatpush2.bf16.msra.mxu0 0
    %255 = vmatprep.subr.bf16.mxu0 0
    %256 = vmatpush2.bf16.msra.mxu0 0
    %257 = vmatprep.subr.bf16.mxu0 0
    %258 = vmatpush2.bf16.msra.mxu0 0
    %259 = vmatprep.subr.bf16.mxu0 0
    %260 = vmatpush2.bf16.msra.mxu0 0
    %261 = vmatprep.subr.bf16.mxu0 0
    %262 = vmatpush2.bf16.msra.mxu0 0
    %263 = vmatprep.subr.bf16.mxu0 0
    %264 = vmatpush2.bf16.msra.mxu0 0
    %265 = vmatprep.subr.bf16.mxu0 0
    %266 = vmatpush2.bf16.msra.mxu0 0
    %267 = vmatprep.mubr.bf16.mxu0 0
    %268 = vmatmul.mubr.bf16.gmra.mxu0 %v226
    %v269 = vpop.f32.mrf.mxu0
    %v270 = vadd.f32 0.0, %v269
    %v271 = vpop.f32.mrf.mxu0
    %v272 = vpop.f32.mrf.mxu0
    %v273 = vadd.f32 0.0, %v272
    %v274 = vpop.f32.mrf.mxu0
    %275 = vmatprep.mubr.bf16.mxu0 0
    %276 = vmatmul.mubr.bf16.gmra.mxu0 %v229
    %v277 = vpop.f32.mrf.mxu0
    %v278 = vadd.f32 0.0, %v277
    %v279 = vpop.f32.mrf.mxu0
    %v280 = vpop.f32.mrf.mxu0
    %v281 = vadd.f32 0.0, %v280
    %v282 = vpop.f32.mrf.mxu0
    %283 = vdwg.mxu0
    %v284 = vadd.f32 %v199, %v270
    %v285 = vadd.f32 %v202, %v273
    %v286 = vadd.f32 %v207, %v278
    %v287 = vadd.f32 %v210, %v281
    %v288 = vld [vmem:[%s7] sm:$0x1]
    %v290 = vlaneseq
    %v291 = vshrl.u32 %v290, 7
    %v292 = vsub.s32 0, %v291
    %v293 = vrot.slane %v288, %v292
    %v295 = vadd.f32 %v284, %v293
    %v296 = vadd.f32 %v285, %v293
    %v297 = vadd.f32 %v286, %v293
    %v298 = vadd.f32 %v287, %v293
    %v299 = vmax.f32 %v295, 0.0
    %v300 = vmax.f32 %v296, 0.0
    %v301 = vmax.f32 %v297, 0.0
    %v302 = vmax.f32 %v298, 0.0
    %v303 = vpack.c.bf16 %v300, %v299
    %v304 = vpack.c.bf16 %v302, %v301
    %v305 = vld [vmem:[%s8] sm:$0xf]
    %v306 = vld [vmem:[%s8 + $0x4] sm:$0xf]
    %v307 = vld [vmem:[%s8 + $0x8] sm:$0xf]
    %v308 = vld [vmem:[%s8 + $0xc] sm:$0xf]
    %v309 = vld [vmem:[%s9] sm:$0x1]
    %v311 = vlaneseq
    %v312 = vshrl.u32 %v311, 7
    %v313 = vsub.s32 0, %v312
    %v314 = vrot.slane %v309, %v313
    %v320 = vunpack.c.l.b16 %v305
    %v321 = vunpack.c.l.b16 %v306
    %v322 = vunpack.c.l.b16 %v307
    %v323 = vunpack.c.l.b16 %v308
    %v324 = vpack.c.b16 %v321, %v320
    %v325 = vpack.c.b16 %v323, %v322
    %vm328 = vcmask 261120
    %v330 = vsel %vm328, %v303, 0
    %v333 = vsel %vm328, %v304, 0
    %335 = vmatprep.subr.bf16.mxu0 0
    %336 = vmatpush1.bf16.msra.mxu0 0
    %337 = vmatprep.subr.bf16.mxu0 0
    %338 = vmatpush1.bf16.msra.mxu0 0
    %339 = vmatprep.subr.bf16.mxu0 0
    %340 = vmatpush1.bf16.msra.mxu0 0
    %341 = vmatprep.subr.bf16.mxu0 0
    %342 = vmatpush1.bf16.msra.mxu0 0
    %343 = vmatprep.subr.bf16.mxu0 0
    %344 = vmatpush1.bf16.msra.mxu0 0
    %345 = vmatprep.subr.bf16.mxu0 0
    %346 = vmatpush1.bf16.msra.mxu0 0
    %347 = vmatprep.subr.bf16.mxu0 0
    %348 = vmatpush1.bf16.msra.mxu0 %v325
    %349 = vmatprep.subr.bf16.mxu0 0
    %350 = vmatpush1.bf16.msra.mxu0 %v324
    %351 = vmatprep.subr.bf16.mxu0 0
    %352 = vmatpush2.bf16.msra.mxu0 0
    %353 = vmatprep.subr.bf16.mxu0 0
    %354 = vmatpush2.bf16.msra.mxu0 0
    %355 = vmatprep.subr.bf16.mxu0 0
    %356 = vmatpush2.bf16.msra.mxu0 0
    %357 = vmatprep.subr.bf16.mxu0 0
    %358 = vmatpush2.bf16.msra.mxu0 0
    %359 = vmatprep.subr.bf16.mxu0 0
    %360 = vmatpush2.bf16.msra.mxu0 0
    %361 = vmatprep.subr.bf16.mxu0 0
    %362 = vmatpush2.bf16.msra.mxu0 0
    %363 = vmatprep.subr.bf16.mxu0 0
    %364 = vmatpush2.bf16.msra.mxu0 0
    %365 = vmatprep.subr.bf16.mxu0 0
    %366 = vmatpush2.bf16.msra.mxu0 0
    %367 = vmatprep.mubr.bf16.mxu0 0
    %368 = vmatmul.mubr.bf16.gmra.mxu0 %v330
    %v369 = vpop.f32.mrf.mxu0
    %v370 = vadd.f32 %v314, %v369
    %v371 = vpop.f32.mrf.mxu0
    %v372 = vpop.f32.mrf.mxu0
    %v373 = vadd.f32 %v314, %v372
    %v374 = vpop.f32.mrf.mxu0
    %375 = vmatprep.mubr.bf16.mxu0 0
    %376 = vmatmul.mubr.bf16.gmra.mxu0 %v333
    %v377 = vpop.f32.mrf.mxu0
    %v378 = vadd.f32 %v314, %v377
    %v379 = vpop.f32.mrf.mxu0
    %v380 = vpop.f32.mrf.mxu0
    %v381 = vadd.f32 %v314, %v380
    %v382 = vpop.f32.mrf.mxu0
    %383 = vdwg.mxu0
    %v384 = vmax.f32 %v370, 0.0
    %v385 = vmax.f32 %v373, 0.0
    %v386 = vmax.f32 %v378, 0.0
    %v387 = vmax.f32 %v381, 0.0
    %v388 = vpack.c.bf16 %v385, %v384
    %v389 = vpack.c.bf16 %v387, %v386
    %v390 = vld [vmem:[%s10] sm:$0xf]
    %v391 = vld [vmem:[%s10 + $0x4] sm:$0xf]
    %v392 = vld [vmem:[%s10 + $0x8] sm:$0xf]
    %v393 = vld [vmem:[%s10 + $0xc] sm:$0xf]
    %v394 = vld [vmem:[%s10 + $0x10] sm:$0xf]
    %v395 = vld [vmem:[%s10 + $0x14] sm:$0xf]
    %v396 = vld [vmem:[%s10 + $0x18] sm:$0xf]
    %v397 = vld [vmem:[%s10 + $0x1c] sm:$0xf]
    %v398 = vld [vmem:[%s11] sm:$0x1]
    %v400 = vlaneseq
    %v401 = vshrl.u32 %v400, 7
    %v402 = vsub.s32 0, %v401
    %v403 = vrot.slane %v398, %v402
    %v413 = vunpack.c.l.b16 %v390
    %v414 = vunpack.c.l.b16 %v391
    %v415 = vunpack.c.l.b16 %v392
    %v416 = vunpack.c.l.b16 %v393
    %v417 = vunpack.c.l.b16 %v394
    %v418 = vunpack.c.l.b16 %v395
    %v419 = vunpack.c.l.b16 %v396
    %v420 = vunpack.c.l.b16 %v397
    %v421 = vpack.c.b16 %v414, %v413
    %v422 = vpack.c.b16 %v416, %v415
    %v423 = vpack.c.b16 %v418, %v417
    %v424 = vpack.c.b16 %v420, %v419
    %vm429 = vcmask 523264
    %v431 = vsel %vm429, %v388, 0
    %v434 = vsel %vm429, %v389, 0
    %436 = vmatprep.subr.bf16.mxu0 0
    %437 = vmatpush1.bf16.msra.mxu0 0
    %438 = vmatprep.subr.bf16.mxu0 0
    %439 = vmatpush1.bf16.msra.mxu0 0
    %440 = vmatprep.subr.bf16.mxu0 0
    %441 = vmatpush1.bf16.msra.mxu0 0
    %442 = vmatprep.subr.bf16.mxu0 0
    %443 = vmatpush1.bf16.msra.mxu0 0
    %444 = vmatprep.subr.bf16.mxu0 0
    %445 = vmatpush1.bf16.msra.mxu0 %v424
    %446 = vmatprep.subr.bf16.mxu0 0
    %447 = vmatpush1.bf16.msra.mxu0 %v423
    %448 = vmatprep.subr.bf16.mxu0 0
    %449 = vmatpush1.bf16.msra.mxu0 %v422
    %450 = vmatprep.subr.bf16.mxu0 0
    %451 = vmatpush1.bf16.msra.mxu0 %v421
    %452 = vmatprep.subr.bf16.mxu0 0
    %453 = vmatpush2.bf16.msra.mxu0 0
    %454 = vmatprep.subr.bf16.mxu0 0
    %455 = vmatpush2.bf16.msra.mxu0 0
    %456 = vmatprep.subr.bf16.mxu0 0
    %457 = vmatpush2.bf16.msra.mxu0 0
    %458 = vmatprep.subr.bf16.mxu0 0
    %459 = vmatpush2.bf16.msra.mxu0 0
    %460 = vmatprep.subr.bf16.mxu0 0
    %461 = vmatpush2.bf16.msra.mxu0 0
    %462 = vmatprep.subr.bf16.mxu0 0
    %463 = vmatpush2.bf16.msra.mxu0 0
    %464 = vmatprep.subr.bf16.mxu0 0
    %465 = vmatpush2.bf16.msra.mxu0 0
    %466 = vmatprep.subr.bf16.mxu0 0
    %467 = vmatpush2.bf16.msra.mxu0 0
    %468 = vmatprep.mubr.bf16.mxu0 0
    %469 = vmatmul.mubr.bf16.gmra.mxu0 %v431
    %v470 = vpop.f32.mrf.mxu0
    %v471 = vadd.f32 %v403, %v470
    %v472 = vpop.f32.mrf.mxu0
    %v473 = vpop.f32.mrf.mxu0
    %v474 = vadd.f32 %v403, %v473
    %v475 = vpop.f32.mrf.mxu0
    %476 = vmatprep.mubr.bf16.mxu0 0
    %477 = vmatmul.mubr.bf16.gmra.mxu0 %v434
    %v478 = vpop.f32.mrf.mxu0
    %v479 = vadd.f32 %v403, %v478
    %v480 = vpop.f32.mrf.mxu0
    %v481 = vpop.f32.mrf.mxu0
    %v482 = vadd.f32 %v403, %v481
    %v483 = vpop.f32.mrf.mxu0
    %484 = vdwg.mxu0
    %v485 = vmax.f32 %v471, 0.0
    %v486 = vmax.f32 %v474, 0.0
    %v487 = vmax.f32 %v479, 0.0
    %v488 = vmax.f32 %v482, 0.0
    %v489 = vpack.c.bf16 %v486, %v485
    %v490 = vpack.c.bf16 %v488, %v487
    %v491 = vld [vmem:[%s12] sm:$0xf]
    %v492 = vld [vmem:[%s12 + $0x4] sm:$0xf]
    %v493 = vld [vmem:[%s12 + $0x8] sm:$0xf]
    %v494 = vld [vmem:[%s12 + $0xc] sm:$0xf]
    %v495 = vld [vmem:[%s13] sm:$0x1]
    %v497 = vlaneseq
    %v498 = vshrl.u32 %v497, 7
    %v499 = vsub.s32 0, %v498
    %v500 = vrot.slane %v495, %v499
    %v506 = vunpack.c.l.b16 %v491
    %v507 = vunpack.c.l.b16 %v492
    %v508 = vunpack.c.l.b16 %v493
    %v509 = vunpack.c.l.b16 %v494
    %v510 = vpack.c.b16 %v507, %v506
    %v511 = vpack.c.b16 %v509, %v508
    %v515 = vsel %vm328, %v489, 0
    %v518 = vsel %vm328, %v490, 0
    %520 = vmatprep.subr.bf16.mxu0 0
    %521 = vmatpush1.bf16.msra.mxu0 0
    %522 = vmatprep.subr.bf16.mxu0 0
    %523 = vmatpush1.bf16.msra.mxu0 0
    %524 = vmatprep.subr.bf16.mxu0 0
    %525 = vmatpush1.bf16.msra.mxu0 0
    %526 = vmatprep.subr.bf16.mxu0 0
    %527 = vmatpush1.bf16.msra.mxu0 0
    %528 = vmatprep.subr.bf16.mxu0 0
    %529 = vmatpush1.bf16.msra.mxu0 0
    %530 = vmatprep.subr.bf16.mxu0 0
    %531 = vmatpush1.bf16.msra.mxu0 0
    %532 = vmatprep.subr.bf16.mxu0 0
    %533 = vmatpush1.bf16.msra.mxu0 %v511
    %534 = vmatprep.subr.bf16.mxu0 0
    %535 = vmatpush1.bf16.msra.mxu0 %v510
    %536 = vmatprep.subr.bf16.mxu0 0
    %537 = vmatpush2.bf16.msra.mxu0 0
    %538 = vmatprep.subr.bf16.mxu0 0
    %539 = vmatpush2.bf16.msra.mxu0 0
    %540 = vmatprep.subr.bf16.mxu0 0
    %541 = vmatpush2.bf16.msra.mxu0 0
    %542 = vmatprep.subr.bf16.mxu0 0
    %543 = vmatpush2.bf16.msra.mxu0 0
    %544 = vmatprep.subr.bf16.mxu0 0
    %545 = vmatpush2.bf16.msra.mxu0 0
    %546 = vmatprep.subr.bf16.mxu0 0
    %547 = vmatpush2.bf16.msra.mxu0 0
    %548 = vmatprep.subr.bf16.mxu0 0
    %549 = vmatpush2.bf16.msra.mxu0 0
    %550 = vmatprep.subr.bf16.mxu0 0
    %551 = vmatpush2.bf16.msra.mxu0 0
    %552 = vmatprep.mubr.bf16.mxu0 0
    %553 = vmatmul.mubr.bf16.gmra.mxu0 %v515
    %v554 = vpop.f32.mrf.mxu0
    %v555 = vadd.f32 %v500, %v554
    %v556 = vpop.f32.mrf.mxu0
    %v557 = vpop.f32.mrf.mxu0
    %v558 = vadd.f32 %v500, %v557
    %v559 = vpop.f32.mrf.mxu0
    %560 = vmatprep.mubr.bf16.mxu0 0
    %561 = vmatmul.mubr.bf16.gmra.mxu0 %v518
    %v562 = vpop.f32.mrf.mxu0
    %v563 = vadd.f32 %v500, %v562
    %v564 = vpop.f32.mrf.mxu0
    %v565 = vpop.f32.mrf.mxu0
    %v566 = vadd.f32 %v500, %v565
    %v567 = vpop.f32.mrf.mxu0
    %568 = vdwg.mxu0
    %v569 = vlaneseq
    %v570 = vshrl.u32 %v569, 7
    %v571 = vadd.s32 %v570, 8
    %v572 = vld [vmem:[%s0] sm:$0x1]
    %v573 = vlaneseq
    %v574 = vshrl.u32 %v573, 7
    %v575 = vsub.s32 0, %v574
    %v576 = vrot.slane %v572, %v575
    %vm577 = vcmp.eq.s32.totalorder %v576, %v570
    %vm578 = vcmp.eq.s32.totalorder %v576, %v571
    %v579 = vsel %vm577, 1, 0
    %v580 = vsel %vm578, 1, 0
    %v581 = vcvt.s32.f32 %v579
    %v582 = vcvt.s32.f32 %v580
    %v583 = vpack.c.bf16 %v582, %v581
    %v584 = vld [vmem:[#allocation2] sm:$0xff]
    %v585 = vld [vmem:[#allocation2 + $0x8] sm:$0xff]
    %v586 = vpack.c.bf16 %v558, %v555
    %v587 = vpack.c.bf16 %v566, %v563
    %v589 = vsel %vm328, %v583, 0
    %591 = vmatprep.subr.bf16.mxu0 0
    %592 = vmatpush1.bf16.msra.mxu0 0
    %593 = vmatprep.subr.bf16.mxu0 0
    %594 = vmatpush1.bf16.msra.mxu0 0
    %595 = vmatprep.subr.bf16.mxu0 0
    %596 = vmatpush1.bf16.msra.mxu0 0
    %597 = vmatprep.subr.bf16.mxu0 0
    %598 = vmatpush1.bf16.msra.mxu0 0
    %599 = vmatprep.subr.bf16.mxu0 0
    %600 = vmatpush1.bf16.msra.mxu0 0
    %601 = vmatprep.subr.bf16.mxu0 0
    %602 = vmatpush1.bf16.msra.mxu0 0
    %603 = vmatprep.subr.bf16.mxu0 0
    %604 = vmatpush1.bf16.msra.mxu0 %v587
    %605 = vmatprep.subr.bf16.mxu0 0
    %606 = vmatpush1.bf16.msra.mxu0 %v586
    %607 = vmatprep.subr.bf16.mxu0 0
    %608 = vmatpush2.bf16.msra.mxu0 0
    %609 = vmatprep.subr.bf16.mxu0 0
    %610 = vmatpush2.bf16.msra.mxu0 0
    %611 = vmatprep.subr.bf16.mxu0 0
    %612 = vmatpush2.bf16.msra.mxu0 0
    %613 = vmatprep.subr.bf16.mxu0 0
    %614 = vmatpush2.bf16.msra.mxu0 0
    %615 = vmatprep.subr.bf16.mxu0 0
    %616 = vmatpush2.bf16.msra.mxu0 0
    %617 = vmatprep.subr.bf16.mxu0 0
    %618 = vmatpush2.bf16.msra.mxu0 0
    %619 = vmatprep.subr.bf16.mxu0 0
    %620 = vmatpush2.bf16.msra.mxu0 0
    %621 = vmatprep.subr.bf16.mxu0 0
    %622 = vmatpush2.bf16.msra.mxu0 0
    %623 = vmatprep.mubr.bf16.mxu0 0
    %624 = vmatmul.mubr.bf16.gmra.mxu0 %v589
    %v625 = vpop.f32.mrf.mxu0
    %v626 = vadd.f32 0.0, %v625
    %v627 = vpop.f32.mrf.mxu0
    %v628 = vpop.f32.mrf.mxu0
    %v629 = vadd.f32 0.0, %v628
    %v630 = vpop.f32.mrf.mxu0
    %631 = vdwg.mxu0
    %v632 = vadd.f32 %v584, %v626
    %v633 = vadd.f32 %v585, %v629
    %634 = vst.msk [vmem:[#allocation2] sm:$0xff] %vm157, %v632
    %635 = vst.msk [vmem:[#allocation2 + $0x8] sm:$0xff] %vm157, %v633
    // Predicated region
    $region62: #{tpu_custom_call.1} parent=1 // pred_check
      _
    $region63: #{tpu_custom_call.1} parent=1 // pred_check_branch
      %637 = sbr.rel (0) target = $region65
    $region64: #{tpu_custom_call.1} parent=1 // pred_region
      %s639 = ssub.s32 256, 256
      %640 = vsyncadd [#allocation3], %s639
      %s641 = sshll.u32 [#allocation2], 4
      %s642 = int_to_ptr.vmem [resolvable:$true] %s641
      %647 = dma.vmem_to_hbm [thread:$0]  %s642, 256, %s14, [#allocation3], 128, 128, 8
    $region65: #{tpu_custom_call.1} parent=1 // pred_fallthru
      _
    // Predicated region
    $region66: #{tpu_custom_call.1} parent=1 // pred_check
      _
    $region67: #{tpu_custom_call.1} parent=1 // pred_check_branch
      %649 = sbr.rel (0) target = $region69
    $region68: #{tpu_custom_call.1} parent=1 // pred_region
      %650 = dma.done [#allocation3], 256
    $region69: #{tpu_custom_call.1} parent=1 // pred_fallthru
      _
    %651 = vsyncpa [#allocation3], 1

</llo_original>
